<compile_context>
chip_gen: v7x
topology: tpu7x:2x2x1
jax: 0.10.0
libtpu: 0.0.40
codegen_flags: <defaults>
</compile_context>

<pallas_src>
import functools

import jax
import jax.numpy as jnp
from jax.experimental import pallas as pl
from jax.experimental.pallas import tpu as pltpu


EPS = 1e-6


def _round_up(x, m):
    return ((x + m - 1) // m) * m


def _vmem_limits():
    """(vmem_limit_bytes for the compiler, byte budget used for tile selection)."""
    try:
        cap = int(pltpu.get_tpu_info().vmem_capacity_bytes)
    except Exception:
        cap = 64 << 20                       # conservative fallback (v7x-sized VMEM)
    vmem_limit = max(16 << 20, min(cap - (8 << 20), 100 << 20))
    tile_budget = int(vmem_limit * 0.85)     # leave headroom for compiler-internal scratch
    return vmem_limit, tile_budget


def _layernorm_f32(x, a2, b2, h_valid):
    """x: (tr, Hp) f32. Padded lanes (>= h_valid) of x / a2 / b2 are zero, so the result is
    exactly zero on padded lanes."""
    hp = x.shape[-1]
    mean = jnp.sum(x, axis=-1, keepdims=True) * (1.0 / h_valid)
    centered = x - mean
    if h_valid != hp:
        lane = jax.lax.broadcasted_iota(jnp.int32, x.shape, x.ndim - 1)
        centered = jnp.where(lane < h_valid, centered, 0.0)
    # Two-pass unbiased variance (ddof=1), matching torch.std.
    var = jnp.sum(centered * centered, axis=-1, keepdims=True) * (1.0 / max(h_valid - 1, 1))
    std = jnp.sqrt(var)
    inv = pl.reciprocal(std + EPS, approx=True)   # EUP slot; ~2^-12 rel. err vs exact divide
    return a2 * (centered * inv) + b2


def _kernel_full_weight(x_ref, a2_ref, b2_ref, w_ref, bias_ref, o_ref, *, h_valid):
    # Grid: (row_tiles,). Whole bf16 weight is resident (constant block index -> DMA'd once).
    x = x_ref[...].astype(jnp.float32)
    normed = _layernorm_f32(x, a2_ref[...], b2_ref[...], h_valid)
    sub = jnp.dot(normed.astype(w_ref.dtype), w_ref[...],
                  preferred_element_type=jnp.float32) + bias_ref[...]
    # Dropout (eval mode) is the identity; residual add in f32.
    o_ref[...] = (x + sub).astype(o_ref.dtype)


def _kernel_weight_tiled(x_ref, a2_ref, b2_ref, w_ref, bias_ref, o_ref, normed_ref,
                         *, h_valid, nt):
    # Grid: (row_tiles, n_tiles). LayerNorm computed once per row tile (j == 0) into a bf16
    # VMEM scratch and reused for every output-column tile j ("arbitrary" axis).
    j = pl.program_id(1)

    @pl.when(j == 0)
    def _():
        x = x_ref[...].astype(jnp.float32)
        normed = _layernorm_f32(x, a2_ref[...], b2_ref[...], h_valid)
        normed_ref[...] = normed.astype(normed_ref.dtype)

    sub = jnp.dot(normed_ref[...], w_ref[...],
                  preferred_element_type=jnp.float32) + bias_ref[...]

    # Residual slice taken from the resident full-row x block (no duplicated x operand).
    col0 = pl.multiple_of(j * nt, 128)
    resid = x_ref[:, pl.ds(col0, nt)].astype(jnp.float32)
    o_ref[...] = (resid + sub).astype(o_ref.dtype)


def make_sublayer_connection(a2, b2, w, bias, *, row_tile=None, n_tile=None):
    """One-time parameter padding / bf16 cast + geometry selection.

    Returns a jitted function x -> x + dense(layernorm(x)) (eval-mode dropout)."""
    H = int(w.shape[0])
    vmem_limit, tile_budget = _vmem_limits()

    Hp128 = _round_up(H, 128)
    # Full weight resident iff the double-buffered bf16 weight fits ~half the tile budget
    # (Hp <= ~3.3k on v5e/v6e, ~2.4k on v7x).
    full_weight = (2 * Hp128 * Hp128 * 2) <= tile_budget // 2

    if full_weight:
        Hp = Hp128
        nt = Hp
    else:
        nt = 512 if n_tile is None else max(256, _round_up(int(n_tile), 256))
        if 2 * _round_up(H, nt) * nt * 2 > tile_budget // 3:
            nt = 256                                   # tight-VMEM parts (v7x / fallback)
        Hp = _round_up(H, nt)

    # --- one-time parameter padding / casting (out of the per-call hot path) ---
    a2p = jnp.pad(a2.astype(jnp.float32), (0, Hp - H)).reshape(1, Hp)
    b2p = jnp.pad(b2.astype(jnp.float32), (0, Hp - H)).reshape(1, Hp)
    wp = jnp.pad(w.astype(jnp.float32), ((0, Hp - H), (0, Hp - H))).astype(jnp.bfloat16)
    biasp = jnp.pad(bias.astype(jnp.float32), (0, Hp - H)).reshape(1, Hp)

    def apply(x):
        B, S, Hx = x.shape
        assert Hx == H, (Hx, H)
        R = B * S
        xb = x.dtype.itemsize
        ob = xb                                        # output dtype = input dtype

        # --- row tile from the per-generation VMEM budget ---
        if row_tile is None:
            w_blk = 2 * Hp * nt * 2                    # double-buffered bf16 weight block
            per_row = (2 * Hp * xb                     # double-buffered x rows
                       + 2 * nt * ob                   # double-buffered output tile
                       + (0 if full_weight else Hp * 2)  # bf16 normed scratch
                       + 2 * Hp * 4)                   # f32 LayerNorm temporaries
            avail = max(tile_budget - w_blk - (4 << 20), per_row * 8)
            tr = max(8, min(1024, (avail // per_row) // 8 * 8))
        else:
            tr = max(8, _round_up(int(row_tile), 8))
        tr = min(tr, _round_up(R, 8))
        if R >= 16:
            tr = min(tr, _round_up((R + 1) // 2, 8))   # >= 2 row tiles -> both TCs busy (v7x)

        rows = pl.cdiv(R, tr)                          # ragged last row tile handled by Pallas

        xr = x.reshape(R, H)
        if Hp != H:                                    # only pad lanes when H % 128 != 0
            xr = jnp.pad(xr, ((0, 0), (0, Hp - H)))

        cost = pl.CostEstimate(
            flops=2 * R * Hp * Hp + 10 * R * Hp,
            transcendentals=2 * R,
            bytes_accessed=(R * Hp * xb                                  # x (single stream)
                            + (1 if full_weight else rows) * Hp * Hp * 2  # bf16 weight
                            + R * Hp * ob                                # output
                            + 4 * Hp * 4),                               # params
        )

        if full_weight:
            out = pl.pallas_call(
                functools.partial(_kernel_full_weight, h_valid=H),
                out_shape=jax.ShapeDtypeStruct((R, Hp), x.dtype),
                grid=(rows,),
                in_specs=[
                    pl.BlockSpec((tr, Hp), lambda i: (i, 0)),   # x rows
                    pl.BlockSpec((1, Hp), lambda i: (0, 0)),    # a_2
                    pl.BlockSpec((1, Hp), lambda i: (0, 0)),    # b_2
                    pl.BlockSpec((Hp, Hp), lambda i: (0, 0)),   # whole weight, DMA'd once
                    pl.BlockSpec((1, Hp), lambda i: (0, 0)),    # bias
                ],
                out_specs=pl.BlockSpec((tr, Hp), lambda i: (i, 0)),
                compiler_params=pltpu.CompilerParams(
                    dimension_semantics=("parallel",),
                    vmem_limit_bytes=vmem_limit),
                cost_estimate=cost,
            )(xr, a2p, b2p, wp, biasp)
        else:
            out = pl.pallas_call(
                functools.partial(_kernel_weight_tiled, h_valid=H, nt=nt),
                out_shape=jax.ShapeDtypeStruct((R, Hp), x.dtype),
                grid=(rows, Hp // nt),
                in_specs=[
                    pl.BlockSpec((tr, Hp), lambda i, j: (i, 0)),  # x rows (resident across j)
                    pl.BlockSpec((1, Hp), lambda i, j: (0, 0)),   # a_2
                    pl.BlockSpec((1, Hp), lambda i, j: (0, 0)),   # b_2
                    pl.BlockSpec((Hp, nt), lambda i, j: (0, j)),  # weight, N-tiled (bf16)
                    pl.BlockSpec((1, nt), lambda i, j: (0, j)),   # bias
                ],
                out_specs=pl.BlockSpec((tr, nt), lambda i, j: (i, j)),
                scratch_shapes=[pltpu.VMEM((tr, Hp), jnp.bfloat16)],  # normed(x)
                compiler_params=pltpu.CompilerParams(
                    dimension_semantics=("parallel", "arbitrary"),
                    vmem_limit_bytes=vmem_limit),
                cost_estimate=cost,
            )(xr, a2p, b2p, wp, biasp)

        if Hp != H:
            out = out[:, :H]
        return out.reshape(B, S, H)

    return jax.jit(apply)


if __name__ == "__main__":
    B, S, H = 2, 8, 32

    key = jax.random.PRNGKey(0)
    kx, kw, kb = jax.random.split(key, 3)

    x = jax.random.normal(kx, (B, S, H), dtype=jnp.float32)

    # LayerNorm params (as in __init__): ones / zeros
    a2 = jnp.ones((H,), dtype=jnp.float32)
    b2 = jnp.zeros((H,), dtype=jnp.float32)

    # Deterministic sublayer (dense H -> H) parameters
    w = jax.random.normal(kw, (H, H), dtype=jnp.float32) * 0.05
    bias = jax.random.normal(kb, (H,), dtype=jnp.float32) * 0.01

    sublayer_connection = make_sublayer_connection(a2, b2, w, bias)
    out = jax.block_until_ready(sublayer_connection(x))

    # Pure-JAX reference of the module math (f32 throughout).  Kernel does the matmul in
    # bf16 and uses an approximate reciprocal, so compare at bf16-appropriate tolerance.
    mean = jnp.mean(x, axis=-1, keepdims=True)
    std = jnp.sqrt(jnp.sum((x - mean) ** 2, axis=-1, keepdims=True) / (H - 1))
    normed = a2 * (x - mean) / (std + EPS) + b2
    ref = x + (jnp.einsum("bsh,hk->bsk", normed, w) + bias)
    err = float(jnp.max(jnp.abs(out - ref)))
    assert jnp.allclose(out, ref, atol=1e-2, rtol=1e-2), err

    print("KERNEL_OK")
</pallas_src>

<mosaic_0001>
module attributes {stable_mosaic.version = 11 : i64} {
  func.func @_kernel_full_weight(%arg0: i32, %arg1: memref<8x128xf32, #tpu.memory_space<vmem>>, %arg2: memref<1x128xf32, #tpu.memory_space<vmem>>, %arg3: memref<1x128xf32, #tpu.memory_space<vmem>>, %arg4: memref<128x128xbf16, #tpu.memory_space<vmem>>, %arg5: memref<1x128xf32, #tpu.memory_space<vmem>>, %arg6: memref<8x128xf32, #tpu.memory_space<vmem>>) attributes {dimension_semantics = [#tpu.dimension_semantics<parallel>], iteration_bounds = array<i64: 2>, scalar_prefetch = 0 : i64, scratch_operands = 0 : i64, tpu.core_type = #tpu.core_type<tc>, window_params = [{transform_indices = @transform_0, window_bounds = array<i64: 8, 128>}, {pipeline_mode = #tpu.pipeline_mode<synchronous>, transform_indices = @transform_1, window_bounds = array<i64: 1, 128>}, {pipeline_mode = #tpu.pipeline_mode<synchronous>, transform_indices = @transform_2, window_bounds = array<i64: 1, 128>}, {pipeline_mode = #tpu.pipeline_mode<synchronous>, transform_indices = @transform_3, window_bounds = array<i64: 128, 128>}, {pipeline_mode = #tpu.pipeline_mode<synchronous>, transform_indices = @transform_4, window_bounds = array<i64: 1, 128>}, {transform_indices = @transform_5, window_bounds = array<i64: 8, 128>}]} {
    %c0 = arith.constant 0 : index
    %c0_0 = arith.constant 0 : index
    %0 = vector.load %arg1[%c0, %c0_0] : memref<8x128xf32, #tpu.memory_space<vmem>>, vector<8x128xf32>
    %c0_1 = arith.constant 0 : index
    %c0_2 = arith.constant 0 : index
    %1 = vector.load %arg2[%c0_1, %c0_2] : memref<1x128xf32, #tpu.memory_space<vmem>>, vector<1x128xf32>
    %c0_3 = arith.constant 0 : index
    %c0_4 = arith.constant 0 : index
    %2 = vector.load %arg3[%c0_3, %c0_4] : memref<1x128xf32, #tpu.memory_space<vmem>>, vector<1x128xf32>
    %cst = arith.constant dense<0.000000e+00> : vector<8xf32>
    %3 = vector.multi_reduction <add>, %0, %cst [1] : vector<8x128xf32> to vector<8xf32>
    %4 = vector.shape_cast %3 : vector<8xf32> to vector<8x1xf32>
    %cst_5 = arith.constant 3.125000e-02 : f32
    %5 = vector.broadcast %cst_5 : f32 to vector<8x1xf32>
    %6 = arith.mulf %4, %5 : vector<8x1xf32>
    %7 = vector.broadcast %6 : vector<8x1xf32> to vector<8x128xf32>
    %8 = arith.subf %0, %7 : vector<8x128xf32>
    %9 = tpu.iota {dimensions = array<i32: 1>} : vector<8x128xi32>
    %c32_i32 = arith.constant 32 : i32
    %10 = vector.broadcast %c32_i32 : i32 to vector<8x128xi32>
    %11 = arith.cmpi slt, %9, %10 : vector<8x128xi32>
    %cst_6 = arith.constant 0.000000e+00 : f32
    %12 = vector.broadcast %cst_6 : f32 to vector<8x128xf32>
    %13 = arith.select %11, %8, %12 : vector<8x128xi1>, vector<8x128xf32>
    %14 = arith.mulf %13, %13 : vector<8x128xf32>
    %cst_7 = arith.constant dense<0.000000e+00> : vector<8xf32>
    %15 = vector.multi_reduction <add>, %14, %cst_7 [1] : vector<8x128xf32> to vector<8xf32>
    %16 = vector.shape_cast %15 : vector<8xf32> to vector<8x1xf32>
    %cst_8 = arith.constant 0.0322580636 : f32
    %17 = vector.broadcast %cst_8 : f32 to vector<8x1xf32>
    %18 = arith.mulf %16, %17 : vector<8x1xf32>
    %19 = math.sqrt %18 : vector<8x1xf32>
    %cst_9 = arith.constant 9.99999997E-7 : f32
    %20 = vector.broadcast %cst_9 : f32 to vector<8x1xf32>
    %21 = arith.addf %19, %20 : vector<8x1xf32>
    %22 = tpu.reciprocal %21 {approx = true} : vector<8x1xf32> -> vector<8x1xf32>
    %23 = vector.broadcast %22 : vector<8x1xf32> to vector<8x128xf32>
    %24 = arith.mulf %13, %23 : vector<8x128xf32>
    %25 = vector.broadcast %1 : vector<1x128xf32> to vector<8x128xf32>
    %26 = arith.mulf %25, %24 : vector<8x128xf32>
    %27 = vector.broadcast %2 : vector<1x128xf32> to vector<8x128xf32>
    %28 = arith.addf %26, %27 : vector<8x128xf32>
    %29 = arith.truncf %28 : vector<8x128xf32> to vector<8x128xbf16>
    %c0_10 = arith.constant 0 : index
    %c0_11 = arith.constant 0 : index
    %30 = vector.load %arg4[%c0_10, %c0_11] : memref<128x128xbf16, #tpu.memory_space<vmem>>, vector<128x128xbf16>
    %cst_12 = arith.constant dense<0.000000e+00> : vector<8x128xf32>
    %31 = tpu.matmul %29, %30, %cst_12 {dimension_numbers = #tpu.dot_dimension_numbers<[1], [0], [0], [1], [0, 0, 1, 1], [], []>} : vector<8x128xbf16>, vector<128x128xbf16>, vector<8x128xf32> -> vector<8x128xf32>
    %c0_13 = arith.constant 0 : index
    %c0_14 = arith.constant 0 : index
    %32 = vector.load %arg5[%c0_13, %c0_14] : memref<1x128xf32, #tpu.memory_space<vmem>>, vector<1x128xf32>
    %33 = vector.broadcast %32 : vector<1x128xf32> to vector<8x128xf32>
    %34 = arith.addf %31, %33 : vector<8x128xf32>
    %35 = arith.addf %0, %34 : vector<8x128xf32>
    %c0_15 = arith.constant 0 : index
    %c0_16 = arith.constant 0 : index
    %36 = vector.load %arg6[%c0_15, %c0_16] : memref<8x128xf32, #tpu.memory_space<vmem>>, vector<8x128xf32>
    tpu.vector_store %arg6[%c0_15, %c0_16], %35 {strides = array<i32>} : memref<8x128xf32, #tpu.memory_space<vmem>>, vector<8x128xf32>,
    return
  }
  func.func @transform_0(%arg0: i32) -> (i32, i32) {
    %c0_i32 = arith.constant 0 : i32
    %c0_i32_0 = arith.constant 0 : i32
    return %arg0, %c0_i32 : i32, i32
  }
  func.func @transform_1(%arg0: i32) -> (i32, i32) {
    %c0_i32 = arith.constant 0 : i32
    %c0_i32_0 = arith.constant 0 : i32
    %c0_i32_1 = arith.constant 0 : i32
    return %c0_i32, %c0_i32_0 : i32, i32
  }
  func.func @transform_2(%arg0: i32) -> (i32, i32) {
    %c0_i32 = arith.constant 0 : i32
    %c0_i32_0 = arith.constant 0 : i32
    %c0_i32_1 = arith.constant 0 : i32
    return %c0_i32, %c0_i32_0 : i32, i32
  }
  func.func @transform_3(%arg0: i32) -> (i32, i32) {
    %c0_i32 = arith.constant 0 : i32
    %c0_i32_0 = arith.constant 0 : i32
    %c0_i32_1 = arith.constant 0 : i32
    return %c0_i32, %c0_i32_0 : i32, i32
  }
  func.func @transform_4(%arg0: i32) -> (i32, i32) {
    %c0_i32 = arith.constant 0 : i32
    %c0_i32_0 = arith.constant 0 : i32
    %c0_i32_1 = arith.constant 0 : i32
    return %c0_i32, %c0_i32_0 : i32, i32
  }
  func.func @transform_5(%arg0: i32) -> (i32, i32) {
    %c0_i32 = arith.constant 0 : i32
    %c0_i32_0 = arith.constant 0 : i32
    return %arg0, %c0_i32 : i32, i32
  }
}

</mosaic_0001>

<llo_original>
// kernel: apply.1
$region0: #{apply.1}
  #allocation0 [shape = 'u32[]', space=smem, size = 0x4, offset = 0x4, fixed_abs, tag = 'smem constant byte address 0x4 - core index']
  #allocation1 [shape = 'u32[144,128]{1,0:T(1,128)}', space=vmem, size = 0x12000, scoped, tag = 'internal scratch']
  %s0 = inlined_call_operand.vmem [shape: f32[16,128], index: 0, kind: input, shape index: {}]
  %s1 = inlined_call_operand.vmem [shape: f32[1,128], index: 1, kind: input, shape index: {}]
  %s2 = inlined_call_operand.vmem [shape: f32[1,128], index: 2, kind: input, shape index: {}]
  %s3 = inlined_call_operand.hbm [shape: bf16[128,128], index: 3, kind: input, shape index: {}]
  %s4 = inlined_call_operand.vmem [shape: f32[1,128], index: 4, kind: input, shape index: {}]
  %s5 = inlined_call_operand.vmem [shape: f32[16,128], index: 5, kind: output, shape index: {}]
  %s6 = sld [smem:[#allocation0]]
  $region57: #{apply.1} parent=0
    _
  %s8 = ssub.s32 1, %s6
  %s9 = scalar_select 0, %s8, %s6
  $region1: #{apply.1} parent=0
    #allocation2 [shape = 'u8[32768]{0}', space=vmem, size = 0x8000, scoped, tag = 'input window, operand 3, single buffered']
    #allocation3 [shape = 's32[2]{0}', space=sflag, size = 0x8, scoped, tag = 'scoped memory for apply.1']
    %10 = vsyncpa [#allocation3], 0
    loop: start=0, step=1, limit=4
    $region2: #{apply.1} parent=1 // loop_pre_header
      _
    $region3: #{apply.1} parent=1 // loop_header
      %s12 = sphi 0, %s16
      %p13 = scmp.ge.s32.totalorder %s12, 4
      %s22 = sphi 0, %s24
      %s25 = sphi 0, %s22
      %s26 = sphi 0, %s25
      %s42 = sphi 0, %s26
      %s46 = sphi 0, %s46
      %s48 = sphi 0, %s46
      %s49 = sphi 0, %s48
      %s63 = sphi 0, %s49
      %s67 = sphi 0, %s67
      %s69 = sphi 0, %s67
      %s70 = sphi 0, %s69
      %s84 = sphi 0, %s70
      %s88 = sphi 0, %s88
      %s90 = sphi 0, %s88
      %s91 = sphi 0, %s90
      %s105 = sphi 0, %s91
      %s109 = sphi 0, %s109
      %s111 = sphi 0, %s109
      %s112 = sphi 0, %s111
      %s126 = sphi 0, %s112
      %s132 = sphi 0, %s134
      %s135 = sphi 0, %s132
      %s136 = sphi 0, %s135
      %s152 = sphi 0, %s136
    $region4: #{apply.1} parent=1 // loop_header_branch
      %15 = sbr.rel (%p13) target = $region8
    $region5: #{apply.1} parent=1 // loop_body
      %s17 = ssub.s32 %s12, 1
      %s18 = ssub.s32 %s12, 2
      %s19 = sadd.s32 %s12, 1
      %s20 = ssub.s32 %s12, %s19
      %p21 = scmp.eq.s32.totalorder %s20, 0
      %s23 = sadd.s32 %s22, 1
      %s24 = scalar_select %p21, %s22, %s23
      %p27 = pneg %p21
      %p28 = scmp.eq.s32.totalorder %s12, 1
      %p29 = por %p27, %p28
      %p30 = scmp.ne.s32.totalorder %s22, %s25
      %p31 = scmp.eq.s32.totalorder %s12, 0
      %p32 = por %p30, %p31
      %p33 = scmp.ne.s32.totalorder %s22, %s25
      %p34 = scmp.eq.s32.totalorder %s17, 1
      %p35 = por %p33, %p34
      %p36 = scmp.ne.s32.totalorder %s25, %s26
      %p37 = scmp.eq.s32.totalorder %s17, 0
      %p38 = por %p36, %p37
      %p39 = scmp.ne.s32.totalorder %s25, %s26
      %p40 = scmp.eq.s32.totalorder %s18, 1
      %p41 = por %p39, %p40
      %p43 = scmp.ne.s32.totalorder %s26, %s42
      %p44 = scmp.eq.s32.totalorder %s18, 0
      %p45 = por %p43, %p44
      %s47 = sadd.s32 %s46, 1
      %p50 = scmp.eq.s32.totalorder %s12, 1
      %p51 = scmp.ne.s32.totalorder %s46, %s48
      %p52 = scmp.eq.s32.totalorder %s12, 0
      %p53 = por %p51, %p52
      %p54 = scmp.ne.s32.totalorder %s46, %s48
      %p55 = scmp.eq.s32.totalorder %s17, 1
      %p56 = por %p54, %p55
      %p57 = scmp.ne.s32.totalorder %s48, %s49
      %p58 = scmp.eq.s32.totalorder %s17, 0
      %p59 = por %p57, %p58
      %p60 = scmp.ne.s32.totalorder %s48, %s49
      %p61 = scmp.eq.s32.totalorder %s18, 1
      %p62 = por %p60, %p61
      %p64 = scmp.ne.s32.totalorder %s49, %s63
      %p65 = scmp.eq.s32.totalorder %s18, 0
      %p66 = por %p64, %p65
      %s68 = sadd.s32 %s67, 1
      %p71 = scmp.eq.s32.totalorder %s12, 1
      %p72 = scmp.ne.s32.totalorder %s67, %s69
      %p73 = scmp.eq.s32.totalorder %s12, 0
      %p74 = por %p72, %p73
      %p75 = scmp.ne.s32.totalorder %s67, %s69
      %p76 = scmp.eq.s32.totalorder %s17, 1
      %p77 = por %p75, %p76
      %p78 = scmp.ne.s32.totalorder %s69, %s70
      %p79 = scmp.eq.s32.totalorder %s17, 0
      %p80 = por %p78, %p79
      %p81 = scmp.ne.s32.totalorder %s69, %s70
      %p82 = scmp.eq.s32.totalorder %s18, 1
      %p83 = por %p81, %p82
      %p85 = scmp.ne.s32.totalorder %s70, %s84
      %p86 = scmp.eq.s32.totalorder %s18, 0
      %p87 = por %p85, %p86
      %s89 = sadd.s32 %s88, 1
      %p92 = scmp.eq.s32.totalorder %s12, 1
      %p93 = scmp.ne.s32.totalorder %s88, %s90
      %p94 = scmp.eq.s32.totalorder %s12, 0
      %p95 = por %p93, %p94
      %p96 = scmp.ne.s32.totalorder %s88, %s90
      %p97 = scmp.eq.s32.totalorder %s17, 1
      %p98 = por %p96, %p97
      %p99 = scmp.ne.s32.totalorder %s90, %s91
      %p100 = scmp.eq.s32.totalorder %s17, 0
      %p101 = por %p99, %p100
      %p102 = scmp.ne.s32.totalorder %s90, %s91
      %p103 = scmp.eq.s32.totalorder %s18, 1
      %p104 = por %p102, %p103
      %p106 = scmp.ne.s32.totalorder %s91, %s105
      %p107 = scmp.eq.s32.totalorder %s18, 0
      %p108 = por %p106, %p107
      %s110 = sadd.s32 %s109, 1
      %p113 = scmp.eq.s32.totalorder %s12, 1
      %p114 = scmp.ne.s32.totalorder %s109, %s111
      %p115 = scmp.eq.s32.totalorder %s12, 0
      %p116 = por %p114, %p115
      %p117 = scmp.ne.s32.totalorder %s109, %s111
      %p118 = scmp.eq.s32.totalorder %s17, 1
      %p119 = por %p117, %p118
      %p120 = scmp.ne.s32.totalorder %s111, %s112
      %p121 = scmp.eq.s32.totalorder %s17, 0
      %p122 = por %p120, %p121
      %p123 = scmp.ne.s32.totalorder %s111, %s112
      %p124 = scmp.eq.s32.totalorder %s18, 1
      %p125 = por %p123, %p124
      %p127 = scmp.ne.s32.totalorder %s112, %s126
      %p128 = scmp.eq.s32.totalorder %s18, 0
      %p129 = por %p127, %p128
      %s130 = ssub.s32 %s12, %s19
      %p131 = scmp.eq.s32.totalorder %s130, 0
      %s133 = sadd.s32 %s132, 1
      %s134 = scalar_select %p131, %s132, %s133
      %p137 = pneg %p131
      %p138 = scmp.eq.s32.totalorder %s12, 1
      %p139 = por %p137, %p138
      %p140 = scmp.ne.s32.totalorder %s132, %s135
      %p141 = scmp.eq.s32.totalorder %s12, 0
      %p142 = por %p140, %p141
      %p143 = scmp.ne.s32.totalorder %s132, %s135
      %p144 = scmp.eq.s32.totalorder %s17, 1
      %p145 = por %p143, %p144
      %p146 = scmp.ne.s32.totalorder %s135, %s136
      %p147 = scmp.eq.s32.totalorder %s17, 0
      %p148 = por %p146, %p147
      %p149 = scmp.ne.s32.totalorder %s135, %s136
      %p150 = scmp.eq.s32.totalorder %s18, 1
      %p151 = por %p149, %p150
      %p153 = scmp.ne.s32.totalorder %s136, %s152
      %p154 = scmp.eq.s32.totalorder %s18, 0
      %p155 = por %p153, %p154
      %p156 = scmp.le.s32.totalorder 1, %s12
      %p157 = scmp.lt.s32.totalorder %s12, 3
      %p158 = pnand %p156, %p157
      %p159 = pneg %p158
      // Predicated region
      $region9: #{apply.1} parent=5 // pred_check
        _
      $region10: #{apply.1} parent=5 // pred_check_branch
        %161 = sbr.rel (%p158) target = $region12
      $region11: #{apply.1} parent=5 // pred_region
        %s162 = ssub.s32 %s12, 1
        // Predicated region
        $region13: #{apply.1} parent=11 // pred_check
          %p163 = pneg %p59
        $region14: #{apply.1} parent=11 // pred_check_branch
          %165 = sbr.rel (%p163) target = $region16
        $region15: #{apply.1} parent=11 // pred_region
          _
        $region16: #{apply.1} parent=11 // pred_fallthru
          _
        // Predicated region
        $region17: #{apply.1} parent=11 // pred_check
          %p166 = pneg %p80
        $region18: #{apply.1} parent=11 // pred_check_branch
          %168 = sbr.rel (%p166) target = $region20
        $region19: #{apply.1} parent=11 // pred_region
          _
        $region20: #{apply.1} parent=11 // pred_fallthru
          _
        // Predicated region
        $region21: #{apply.1} parent=11 // pred_check
          %p169 = pneg %p101
        $region22: #{apply.1} parent=11 // pred_check_branch
          %171 = sbr.rel (%p169) target = $region24
        $region23: #{apply.1} parent=11 // pred_region
          %s173 = ssub.s32 1024, 1024
          %174 = vsyncadd [#allocation3], %s173
          %s175 = sshll.u32 [#allocation2], 4
          %s176 = int_to_ptr.vmem [resolvable:$true] %s175
          %181 = dma.hbm_to_vmem [thread:$0]  %s3, 1024, %s176, [#allocation3], 64, 64, 4
        $region24: #{apply.1} parent=11 // pred_fallthru
          _
        // Predicated region
        $region25: #{apply.1} parent=11 // pred_check
          %p182 = pneg %p122
        $region26: #{apply.1} parent=11 // pred_check_branch
          %184 = sbr.rel (%p182) target = $region28
        $region27: #{apply.1} parent=11 // pred_region
          _
        $region28: #{apply.1} parent=11 // pred_fallthru
          _
      $region12: #{apply.1} parent=5 // pred_fallthru
        _
      %p185 = scmp.lt.s32.totalorder %s12, 2
      // Predicated region
      $region29: #{apply.1} parent=5 // pred_check
        %p186 = pneg %p185
      $region30: #{apply.1} parent=5 // pred_check_branch
        %188 = sbr.rel (%p186) target = $region32
      $region31: #{apply.1} parent=5 // pred_region
        // Predicated region
        $region33: #{apply.1} parent=31 // pred_check
          %p189 = pneg %p32
        $region34: #{apply.1} parent=31 // pred_check_branch
          %191 = sbr.rel (%p189) target = $region36
        $region35: #{apply.1} parent=31 // pred_region
          %p192 = scmp.lt.s32.totalorder %s12, 1
          %s193 = scalar_select %p192, %s12, 1
          %s194 = smul.addr %s193, 8
          %s195 = scalar_lea.vmem %s0, %s194
        $region36: #{apply.1} parent=31 // pred_fallthru
          _
      $region32: #{apply.1} parent=5 // pred_fallthru
        _
      %p196 = scmp.le.s32.totalorder 1, %s12
      %p197 = scmp.lt.s32.totalorder %s12, 3
      %p198 = pnand %p196, %p197
      %p199 = pneg %p198
      // Predicated region
      $region37: #{apply.1} parent=5 // pred_check
        _
      $region38: #{apply.1} parent=5 // pred_check_branch
        %201 = sbr.rel (%p198) target = $region40
      $region39: #{apply.1} parent=5 // pred_region
        %s202 = ssub.s32 %s12, 1
        // Predicated region
        $region41: #{apply.1} parent=39 // pred_check
          %p203 = pneg %p101
        $region42: #{apply.1} parent=39 // pred_check_branch
          %205 = sbr.rel (%p203) target = $region44
        $region43: #{apply.1} parent=39 // pred_region
          %206 = dma.done [#allocation3], 1024
        $region44: #{apply.1} parent=39 // pred_fallthru
          _
        %p207 = scmp.lt.s32.totalorder %s17, 1
        %s208 = scalar_select %p207, %s17, 1
        %s209 = smul.addr %s208, 8
        %s210 = scalar_lea.vmem %s0, %s209
        %p211 = pneg %p38
        %p212 = pneg %p35
        %p213 = pneg %p59
        %p214 = pneg %p56
        %p215 = pneg %p80
        %p216 = pneg %p77
        %p217 = pneg %p101
        %p218 = pneg %p98
        %p219 = pneg %p122
        %p220 = pneg %p119
        %p221 = pneg %p148
        %p222 = pneg %p145
        %p223 = scmp.lt.s32.totalorder %s17, 1
        %s224 = scalar_select %p223, %s17, 1
        %s225 = smul.addr %s224, 8
        %s226 = scalar_lea.vmem %s5, %s225
        %p227 = scmp.lt.s32.totalorder %s17, 1
        %s228 = scalar_select %p227, %s17, 1
        %s229 = smul.addr %s228, 8
        %s230 = scalar_lea.vmem %s0, %s229
        %p231 = scmp.lt.s32.totalorder %s17, 1
        %s232 = scalar_select %p231, %s17, 1
        %s233 = smul.addr %s232, 8
        %s234 = scalar_lea.vmem %s5, %s233
        %v236 = vld [vmem:[%s230] sm:$0xff]
        %v237 = vld [vmem:[%s1] sm:$0x1]
        %v238 = vld [vmem:[%s2] sm:$0x1]
        %239 = vadd.xlane.f32.xlu0 %v236
        %v240 = vpop.xlane.xlu0 %239
        %v241 = vmul.f32 %v240, 0.03125
        %v242 = vsub.f32 %v236, %v241
        %v243 = vlaneseq
        %v244 = vand.u32 %v243, 127
        %vm245 = vcmp.lt.s32.totalorder %v244, 32
        %v246 = vsel %vm245, %v242, 0.0
        %v247 = vmul.f32 %v246, %v246
        %248 = vadd.xlane.f32.xlu0 %v247
        %v249 = vpop.xlane.xlu0 %248
        %v250 = vmul.f32 %v249, 0.032258064
        %v251 = vrsqrt.pop %v250
        %v252 = vmul.f32 %v250, %v251
        %vm253 = vcmp.eq.f32.partialorder %v250, inf
        %v254 = vsel %vm253, %v250, %v252
        %vm255 = vcmp.eq.f32.partialorder %v250, 0.0
        %v256 = vand.u32 %v250, 2147483648
        %v257 = vsel %vm255, %v256, %v254
        %v258 = vadd.f32 %v257, 1e-06
        %v259 = vrcp.pop %v258
        %v260 = vmul.f32 %v246, %v259
        %v262 = vlaneseq
        %v263 = vshrl.u32 %v262, 7
        %v264 = vsub.s32 0, %v263
        %v265 = vrot.slane %v237, %v264
        %v267 = vmul.f32 %v265, %v260
        %v269 = vlaneseq
        %v270 = vshrl.u32 %v269, 7
        %v271 = vsub.s32 0, %v270
        %v272 = vrot.slane %v238, %v271
        %v274 = vadd.f32 %v267, %v272
        %v275 = vpack.c.bf16 %v274, %v274
        %v276 = vld [vmem:[#allocation2] sm:$0xf]
        %v277 = vld [vmem:[#allocation2 + $0x4] sm:$0xf]
        %v278 = vld [vmem:[#allocation2 + $0x8] sm:$0xf]
        %v279 = vld [vmem:[#allocation2 + $0xc] sm:$0xf]
        %v280 = vld [vmem:[#allocation2 + $0x10] sm:$0xf]
        %v281 = vld [vmem:[#allocation2 + $0x14] sm:$0xf]
        %v282 = vld [vmem:[#allocation2 + $0x18] sm:$0xf]
        %v283 = vld [vmem:[#allocation2 + $0x1c] sm:$0xf]
        %v284 = vld [vmem:[#allocation2 + $0x20] sm:$0xf]
        %v285 = vld [vmem:[#allocation2 + $0x24] sm:$0xf]
        %v286 = vld [vmem:[#allocation2 + $0x28] sm:$0xf]
        %v287 = vld [vmem:[#allocation2 + $0x2c] sm:$0xf]
        %v288 = vld [vmem:[#allocation2 + $0x30] sm:$0xf]
        %v289 = vld [vmem:[#allocation2 + $0x34] sm:$0xf]
        %v290 = vld [vmem:[#allocation2 + $0x38] sm:$0xf]
        %v291 = vld [vmem:[#allocation2 + $0x3c] sm:$0xf]
        %v292 = vld [vmem:[%s4] sm:$0x1]
        %v294 = vlaneseq
        %v295 = vshrl.u32 %v294, 7
        %v296 = vsub.s32 0, %v295
        %v297 = vrot.slane %v292, %v296
        %v315 = vunpack.c.l.b16 %v276
        %v316 = vunpack.c.l.b16 %v277
        %v317 = vunpack.c.l.b16 %v278
        %v318 = vunpack.c.l.b16 %v279
        %v319 = vunpack.c.l.b16 %v280
        %v320 = vunpack.c.l.b16 %v281
        %v321 = vunpack.c.l.b16 %v282
        %v322 = vunpack.c.l.b16 %v283
        %v323 = vunpack.c.l.b16 %v284
        %v324 = vunpack.c.l.b16 %v285
        %v325 = vunpack.c.l.b16 %v286
        %v326 = vunpack.c.l.b16 %v287
        %v327 = vunpack.c.l.b16 %v288
        %v328 = vunpack.c.l.b16 %v289
        %v329 = vunpack.c.l.b16 %v290
        %v330 = vunpack.c.l.b16 %v291
        %v331 = vpack.c.b16 %v316, %v315
        %v332 = vpack.c.b16 %v318, %v317
        %v333 = vpack.c.b16 %v320, %v319
        %v334 = vpack.c.b16 %v322, %v321
        %v335 = vpack.c.b16 %v324, %v323
        %v336 = vpack.c.b16 %v326, %v325
        %v337 = vpack.c.b16 %v328, %v327
        %v338 = vpack.c.b16 %v330, %v329
        %347 = vmatprep.subr.bf16.mxu0 0
        %348 = vmatpush1.bf16.msra.mxu0 %v331
        %349 = vmatprep.subr.bf16.mxu0 0
        %350 = vmatpush1.bf16.msra.mxu0 %v332
        %351 = vmatprep.subr.bf16.mxu0 0
        %352 = vmatpush1.bf16.msra.mxu0 %v333
        %353 = vmatprep.subr.bf16.mxu0 0
        %354 = vmatpush1.bf16.msra.mxu0 %v334
        %355 = vmatprep.subr.bf16.mxu0 0
        %356 = vmatpush1.bf16.msra.mxu0 %v335
        %357 = vmatprep.subr.bf16.mxu0 0
        %358 = vmatpush1.bf16.msra.mxu0 %v336
        %359 = vmatprep.subr.bf16.mxu0 0
        %360 = vmatpush1.bf16.msra.mxu0 %v337
        %361 = vmatprep.subr.bf16.mxu0 0
        %362 = vmatpush1.bf16.msra.mxu0 %v338
        %363 = vmatprep.subr.bf16.mxu0 0
        %364 = vmatpush1.bf16.msra.mxu0 0
        %365 = vmatprep.subr.bf16.mxu0 0
        %366 = vmatpush1.bf16.msra.mxu0 0
        %367 = vmatprep.subr.bf16.mxu0 0
        %368 = vmatpush1.bf16.msra.mxu0 0
        %369 = vmatprep.subr.bf16.mxu0 0
        %370 = vmatpush1.bf16.msra.mxu0 0
        %371 = vmatprep.subr.bf16.mxu0 0
        %372 = vmatpush1.bf16.msra.mxu0 0
        %373 = vmatprep.subr.bf16.mxu0 0
        %374 = vmatpush1.bf16.msra.mxu0 0
        %375 = vmatprep.subr.bf16.mxu0 0
        %376 = vmatpush1.bf16.msra.mxu0 0
        %377 = vmatprep.subr.bf16.mxu0 0
        %378 = vmatpush1.bf16.msra.mxu0 0
        %379 = vmatprep.mubr.bf16.mxu0 0
        %380 = vmatmul.mubr.bf16.gmra.mrb[0].mxu0 %v275
        %v381 = vpop.f32.mrb[0].mxu0
        %v382 = vadd.f32 %v297, %v381
        %v383 = vpop.f32.mrb[0].mxu0
        %v384 = vpop.f32.mrb[0].mxu0
        %v385 = vpop.f32.mrb[0].mxu0
        %386 = vdwg.mxu0
        %v387 = vadd.f32 %v236, %v382
        %388 = vst [vmem:[%s234] sm:$0xff] %v387
        %p389 = scmp.lt.s32.totalorder %s17, 1
        %s390 = scalar_select %p389, %s17, 1
        %s391 = smul.addr %s390, 8
        %s392 = scalar_lea.vmem %s5, %s391
        // Predicated region
        $region45: #{apply.1} parent=39 // pred_check
          %p393 = pneg %p145
        $region46: #{apply.1} parent=39 // pred_check_branch
          %395 = sbr.rel (%p393) target = $region48
        $region47: #{apply.1} parent=39 // pred_region
          _
        $region48: #{apply.1} parent=39 // pred_fallthru
          _
      $region40: #{apply.1} parent=5 // pred_fallthru
        _
      %p396 = scmp.le.s32.totalorder 2, %s12
      // Predicated region
      $region49: #{apply.1} parent=5 // pred_check
        %p397 = pneg %p396
      $region50: #{apply.1} parent=5 // pred_check_branch
        %399 = sbr.rel (%p397) target = $region52
      $region51: #{apply.1} parent=5 // pred_region
        %s400 = ssub.s32 %s12, 2
        // Predicated region
        $region53: #{apply.1} parent=51 // pred_check
          %p401 = pneg %p151
        $region54: #{apply.1} parent=51 // pred_check_branch
          %403 = sbr.rel (%p401) target = $region56
        $region55: #{apply.1} parent=51 // pred_region
          %p404 = scmp.lt.s32.totalorder %s18, 1
          %s405 = scalar_select %p404, %s18, 1
          %s406 = smul.addr %s405, 8
          %s407 = scalar_lea.vmem %s5, %s406
        $region56: #{apply.1} parent=51 // pred_fallthru
          _
      $region52: #{apply.1} parent=5 // pred_fallthru
        _
    $region6: #{apply.1} parent=1 // loop_footer
      %s16 = sadd.s32 1, %s12
    $region7: #{apply.1} parent=1 // loop_footer_branch
      %11 = sbr.rel target = $region3
    $region8: #{apply.1} parent=1 // loop_exit
      _
    %408 = vsyncpa [#allocation3], 1
    %s409 = scalar_lea.sflag [#allocation3], 1
    %410 = vsyncpa %s409, 1

</llo_original>
